<compile_context>
chip_gen: v7x
topology: tpu7x:2x2x1
jax: 0.10.0
libtpu: 0.0.40
codegen_flags: <defaults>
</compile_context>

<pallas_src>
import jax
import jax.numpy as jnp
import numpy as np
from jax import lax
from jax.experimental import pallas as pl
from jax.experimental.pallas import tpu as pltpu

BN_EPS = 1e-5


def _vmem_limit_bytes(working_bytes):
    # Raise the scoped-VMEM limit when tiles are big (default is 32 MiB on
    # v6e), but never above v7x's 64 MiB physical per-core VMEM.
    return int(min(64 * 2 ** 20, max(32 * 2 ** 20, 2 * working_bytes)))


def _pick_row_tile(H, W, C1, Cm, budget_bytes=4 * 2 ** 20):
    """Largest row-tile TH (divisor of H, multiple of 8 or == H) under budget,
    preferring >=2 row tiles so v7x's two TensorCores both get work."""
    def tile_bytes(th):
        return 4 * (2 * th * W * (Cm + 2 * C1) + (th + 2) * (W + 2) * C1)

    valid = [d for d in range(1, H + 1)
             if H % d == 0 and (d % 8 == 0 or d == H)]
    fitting = [d for d in valid if tile_bytes(d) <= budget_bytes]
    if not fitting:
        return min(valid)
    split = [d for d in fitting if d < H]
    return max(split) if split else H


# ---------------------------------------------------------------------------
# Kernel A: both 1x1 convs on y at its native (low) resolution.
# ---------------------------------------------------------------------------
def _y_lowres_kernel(y_ref, w1_ref, s1_ref, b1_ref, wup_ref, sup_ref, bup_ref,
                     yq_ref, yup_ref):
    _, Hy, Wy, C2 = y_ref.shape
    Cm = w1_ref.shape[1]
    C1 = wup_ref.shape[1]

    y = y_ref[0].reshape(Hy * Wy, C2)

    # MXU operands in bf16, accumulation in f32.
    yq = jnp.dot(jnp.maximum(y, 0.0).astype(jnp.bfloat16), w1_ref[...],
                 preferred_element_type=jnp.float32)
    yq = yq * s1_ref[0] + b1_ref[0]                      # BN (eval)

    yup = jnp.dot(y.astype(jnp.bfloat16), wup_ref[...],  # note: no ReLU (self.up)
                  preferred_element_type=jnp.float32)
    yup = yup * sup_ref[0] + bup_ref[0]                  # BN (eval)

    yq_ref[0] = yq.reshape(Hy, Wy, Cm)
    yup_ref[0] = yup.reshape(Hy, Wy, C1)


def _call_y_lowres(y, p):
    B, Hy, Wy, C2 = y.shape
    Cm = p["w1"].shape[1]
    C1 = p["wup"].shape[1]
    w1 = p["w1"].astype(jnp.bfloat16)
    wup = p["wup"].astype(jnp.bfloat16)

    working = 4 * B and 4 * (Hy * Wy * (C2 + Cm + C1)) * 2
    return pl.pallas_call(
        _y_lowres_kernel,
        out_shape=(jax.ShapeDtypeStruct((B, Hy, Wy, Cm), jnp.float32),
                   jax.ShapeDtypeStruct((B, Hy, Wy, C1), jnp.float32)),
        grid=(B,),
        in_specs=[
            pl.BlockSpec((1, Hy, Wy, C2), lambda b: (b, 0, 0, 0)),
            pl.BlockSpec((C2, Cm), lambda b: (0, 0)),
            pl.BlockSpec((1, Cm), lambda b: (0, 0)),
            pl.BlockSpec((1, Cm), lambda b: (0, 0)),
            pl.BlockSpec((C2, C1), lambda b: (0, 0)),
            pl.BlockSpec((1, C1), lambda b: (0, 0)),
            pl.BlockSpec((1, C1), lambda b: (0, 0)),
        ],
        out_specs=(pl.BlockSpec((1, Hy, Wy, Cm), lambda b: (b, 0, 0, 0)),
                   pl.BlockSpec((1, Hy, Wy, C1), lambda b: (b, 0, 0, 0))),
        compiler_params=pltpu.CompilerParams(
            dimension_semantics=("parallel",),
            vmem_limit_bytes=_vmem_limit_bytes(working)),
    )(y, w1, p["s1"].reshape(1, Cm), p["b1"].reshape(1, Cm),
      wup, p["sup"].reshape(1, C1), p["bup"].reshape(1, C1))


# ---------------------------------------------------------------------------
# Kernel B: fused RGAM main path, tiled over (batch, row-blocks).
#   x_k  = BN(conv3x3(relu(x)))          -- 9 shifted bf16 MXU matmuls
#   edge = sigmoid(sum_c(y_q * x_k))
#   out  = relu((1-edge)*x + edge*y_up + x)
# ---------------------------------------------------------------------------
def _rgam_fused_kernel(xpad_hbm, yq_ref, yup_ref, w3_ref, s3_ref, b3_ref,
                       o_ref, xbuf, copy_sem):
    b = pl.program_id(0)
    h = pl.program_id(1)
    _, TH, W, Cm = yq_ref.shape
    C1 = yup_ref.shape[3]

    # Manual DMA of the (TH+2, W+2, C1) halo row-window of the padded x.
    # This is the ONLY time x's bytes enter the kernel (no duplicate x stream).
    cp = pltpu.make_async_copy(
        xpad_hbm.at[b, pl.ds(h * TH, TH + 2)], xbuf, copy_sem)
    cp.start()
    cp.wait()

    xwin = xbuf[...]                              # (TH+2, W+2, C1), f32
    xr = jnp.maximum(xwin, 0.0)                   # ReLU (zero halo unchanged)

    # 3x3 conv, padding=1, as 9 statically-shifted matmuls (bf16 in, f32 acc).
    acc = jnp.zeros((TH * W, Cm), jnp.float32)
    for dh in range(3):
        for dw in range(3):
            patch = xr[dh:dh + TH, dw:dw + W, :].reshape(TH * W, C1)
            acc = acc + jnp.dot(patch.astype(jnp.bfloat16),
                                w3_ref[dh * 3 + dw],
                                preferred_element_type=jnp.float32)
    x_k = acc * s3_ref[0] + b3_ref[0]             # BatchNorm (eval)

    yq = yq_ref[0].reshape(TH * W, Cm)
    logits = jnp.sum(yq * x_k, axis=1, keepdims=True)
    # sigmoid via EUP exp + approximate EUP reciprocal (keeps VALU slot clear)
    edge = pl.reciprocal(1.0 + jnp.exp(-logits), approx=True)

    y_up = yup_ref[0].reshape(TH * W, C1)
    x_res = xwin[1:TH + 1, 1:W + 1, :].reshape(TH * W, C1)   # raw x (residual)

    out = (1.0 - edge) * x_res + edge * y_up + x_res
    out = jnp.maximum(out, 0.0)                   # final ReLU
    # Lane-denser output block: last dim W*C1 instead of C1.
    o_ref[0] = out.reshape(TH, W * C1)


def _call_rgam_fused(xpad, y_q, y_up, p, *, H, W):
    B = xpad.shape[0]
    C1 = xpad.shape[-1]
    Cm = y_q.shape[-1]

    TH = _pick_row_tile(H, W, C1, Cm)
    nH = H // TH

    w3 = p["w3"].reshape(9, C1, Cm).astype(jnp.bfloat16)
    s3 = p["s3"].reshape(1, Cm)
    b3 = p["b3"].reshape(1, Cm)

    working = 4 * (2 * TH * W * (Cm + 2 * C1) + (TH + 2) * (W + 2) * C1)
    return pl.pallas_call(
        _rgam_fused_kernel,
        out_shape=jax.ShapeDtypeStruct((B, H, W * C1), jnp.float32),
        grid=(B, nH),
        in_specs=[
            pl.BlockSpec(memory_space=pl.ANY),                        # xpad (HBM)
            pl.BlockSpec((1, TH, W, Cm), lambda b, h: (b, h, 0, 0)),  # y_q
            pl.BlockSpec((1, TH, W, C1), lambda b, h: (b, h, 0, 0)),  # y_up
            pl.BlockSpec((9, C1, Cm), lambda b, h: (0, 0, 0)),        # w3 (bf16)
            pl.BlockSpec((1, Cm), lambda b, h: (0, 0)),               # s3
            pl.BlockSpec((1, Cm), lambda b, h: (0, 0)),               # b3
        ],
        out_specs=pl.BlockSpec((1, TH, W * C1), lambda b, h: (b, h, 0)),
        scratch_shapes=[
            pltpu.VMEM((TH + 2, W + 2, C1), jnp.float32),             # halo window
            pltpu.SemaphoreType.DMA,
        ],
        compiler_params=pltpu.CompilerParams(
            dimension_semantics=("parallel", "parallel"),
            vmem_limit_bytes=_vmem_limit_bytes(working)),
    )(xpad, y_q, y_up, w3, s3, b3)


# ---------------------------------------------------------------------------
# Public forward (NCHW in / NCHW out)
# ---------------------------------------------------------------------------
def rgam_forward(x_nchw, y_nchw, p):
    """RGAM forward. x: (B, C1, H, W), y: (B, C2, Hy, Wy) -> (B, C1, H, W)."""
    x = jnp.transpose(x_nchw, (0, 2, 3, 1)).astype(jnp.float32)   # NHWC
    y = jnp.transpose(y_nchw, (0, 2, 3, 1)).astype(jnp.float32)
    B, H, W, C1 = x.shape
    _, Hy, Wy, C2 = y.shape
    Cm = p["w3"].shape[-1]

    # Kernel A: both 1x1-conv branches at LOW resolution (one read of y).
    y_q_lo, y_up_lo = _call_y_lowres(y, p)

    # TODO(synk): fuse the bilinear upsample into kernel B when the scale
    # factor is a fixed integer (2x here); kept in XLA for arbitrary ratios.
    y_q = jax.image.resize(y_q_lo, (B, H, W, Cm), method="bilinear")
    y_up = jax.image.resize(y_up_lo, (B, H, W, C1), method="bilinear")

    # Single padded copy of x; kernel B recovers the residual x as the
    # interior slice of the halo window (no second x stream).
    # TODO(synk): build the zero halo inside the kernel to also drop this
    # pad round-trip through HBM.
    xpad = jnp.pad(x, ((0, 0), (1, 1), (1, 1), (0, 0)))

    out_flat = _call_rgam_fused(xpad, y_q, y_up, p, H=H, W=W)
    out = out_flat.reshape(B, H, W, C1)
    return jnp.transpose(out, (0, 3, 1, 2))


# ---------------------------------------------------------------------------
# Deterministic synthetic parameters (BN folded into scale/bias, eval mode)
# ---------------------------------------------------------------------------
def init_params(key, C1, C2, Cm):
    ks = jax.random.split(key, 9)

    def bn(kg, kb, C):
        gamma = 1.0 + 0.1 * jax.random.normal(kg, (C,), jnp.float32)
        beta = 0.1 * jax.random.normal(kb, (C,), jnp.float32)
        mean = jnp.zeros((C,), jnp.float32)
        var = jnp.ones((C,), jnp.float32)
        scale = gamma / jnp.sqrt(var + BN_EPS)
        bias = beta - mean * scale
        return scale, bias

    w3 = 0.1 * jax.random.normal(ks[0], (3, 3, C1, Cm), jnp.float32)   # HWIO
    w1 = 0.1 * jax.random.normal(ks[1], (C2, Cm), jnp.float32)         # 1x1, IO
    wup = 0.1 * jax.random.normal(ks[2], (C2, C1), jnp.float32)        # 1x1, IO
    s3, b3 = bn(ks[3], ks[4], Cm)
    s1, b1 = bn(ks[5], ks[6], Cm)
    sup, bup = bn(ks[7], ks[8], C1)
    return dict(w3=w3, s3=s3, b3=b3, w1=w1, s1=s1, b1=b1,
                wup=wup, sup=sup, bup=bup)


# ---------------------------------------------------------------------------
# Pure-JAX f32 reference (matches the PyTorch module) for correctness checking
# ---------------------------------------------------------------------------
def rgam_reference(x_nchw, y_nchw, p):
    x = jnp.transpose(x_nchw, (0, 2, 3, 1)).astype(jnp.float32)
    y = jnp.transpose(y_nchw, (0, 2, 3, 1)).astype(jnp.float32)
    B, H, W, C1 = x.shape
    _, Hy, Wy, C2 = y.shape
    dn = ("NHWC", "HWIO", "NHWC")

    y_q = jnp.maximum(y, 0.0)
    y_q = lax.conv_general_dilated(y_q, p["w1"][None, None], (1, 1), "VALID",
                                   dimension_numbers=dn)
    y_q = y_q * p["s1"] + p["b1"]
    y_q = jax.image.resize(y_q, (B, H, W, y_q.shape[-1]), method="bilinear")

    x_k = jnp.maximum(x, 0.0)
    x_k = lax.conv_general_dilated(x_k, p["w3"], (1, 1), "SAME",
                                   dimension_numbers=dn)
    x_k = x_k * p["s3"] + p["b3"]

    edge = jax.nn.sigmoid(jnp.sum(y_q * x_k, axis=-1, keepdims=True))

    y_int = jax.image.resize(y, (B, H, W, C2), method="bilinear")
    y_up = lax.conv_general_dilated(y_int, p["wup"][None, None], (1, 1), "VALID",
                                    dimension_numbers=dn)
    y_up = y_up * p["sup"] + p["bup"]

    out = (1.0 - edge) * x + edge * y_up + x
    out = jnp.maximum(out, 0.0)
    return jnp.transpose(out, (0, 3, 1, 2))


if __name__ == "__main__":
    key = jax.random.PRNGKey(0)
    kx, ky, kp = jax.random.split(key, 3)

    B, C1, C2, Cm = 2, 4, 6, 8       # in_channels=4, in_channels2=6, mid_channels=8
    H, W = 16, 16                    # x spatial (2 row-tiles of 8 exercised)
    Hy, Wy = 8, 8                    # y spatial (upsampled inside the module)

    x = jax.random.normal(kx, (B, C1, H, W), jnp.float32)
    y = jax.random.normal(ky, (B, C2, Hy, Wy), jnp.float32)
    params = init_params(kp, C1, C2, Cm)

    out = jax.block_until_ready(rgam_forward(x, y, params))
    ref = jax.block_until_ready(rgam_reference(x, y, params))

    # Tolerance covers bf16 MXU operands + approximate EUP reciprocal vs the
    # pure-f32 reference.
    np.testing.assert_allclose(np.asarray(out), np.asarray(ref),
                               rtol=3e-2, atol=3e-2)

    print("KERNEL_OK")
</pallas_src>

<mosaic_0001>
module attributes {stable_mosaic.version = 11 : i64} {
  func.func @_y_lowres_kernel(%arg0: i32, %arg1: memref<1x8x8x6xf32, #tpu.memory_space<vmem>>, %arg2: memref<6x8xbf16, #tpu.memory_space<vmem>>, %arg3: memref<1x8xf32, #tpu.memory_space<vmem>>, %arg4: memref<1x8xf32, #tpu.memory_space<vmem>>, %arg5: memref<6x4xbf16, #tpu.memory_space<vmem>>, %arg6: memref<1x4xf32, #tpu.memory_space<vmem>>, %arg7: memref<1x4xf32, #tpu.memory_space<vmem>>, %arg8: memref<1x8x8x8xf32, #tpu.memory_space<vmem>>, %arg9: memref<1x8x8x4xf32, #tpu.memory_space<vmem>>) attributes {dimension_semantics = [#tpu.dimension_semantics<parallel>], iteration_bounds = array<i64: 2>, scalar_prefetch = 0 : i64, scratch_operands = 0 : i64, tpu.core_type = #tpu.core_type<tc>, window_params = [{transform_indices = @transform_0, window_bounds = array<i64: 1, 8, 8, 6>}, {pipeline_mode = #tpu.pipeline_mode<synchronous>, transform_indices = @transform_1, window_bounds = array<i64: 6, 8>}, {pipeline_mode = #tpu.pipeline_mode<synchronous>, transform_indices = @transform_2, window_bounds = array<i64: 1, 8>}, {pipeline_mode = #tpu.pipeline_mode<synchronous>, transform_indices = @transform_3, window_bounds = array<i64: 1, 8>}, {pipeline_mode = #tpu.pipeline_mode<synchronous>, transform_indices = @transform_4, window_bounds = array<i64: 6, 4>}, {pipeline_mode = #tpu.pipeline_mode<synchronous>, transform_indices = @transform_5, window_bounds = array<i64: 1, 4>}, {pipeline_mode = #tpu.pipeline_mode<synchronous>, transform_indices = @transform_6, window_bounds = array<i64: 1, 4>}, {transform_indices = @transform_7, window_bounds = array<i64: 1, 8, 8, 8>}, {transform_indices = @transform_8, window_bounds = array<i64: 1, 8, 8, 4>}]} {
    %c0 = arith.constant 0 : index
    %c0_0 = arith.constant 0 : index
    %c0_1 = arith.constant 0 : index
    %c0_2 = arith.constant 0 : index
    %0 = vector.load %arg1[%c0, %c0_0, %c0_1, %c0_2] : memref<1x8x8x6xf32, #tpu.memory_space<vmem>>, vector<1x8x8x6xf32>
    %1 = vector.shape_cast %0 : vector<1x8x8x6xf32> to vector<8x8x6xf32>
    %2 = vector.shape_cast %1 : vector<8x8x6xf32> to vector<64x6xf32>
    %cst = arith.constant 0.000000e+00 : f32
    %3 = vector.broadcast %cst : f32 to vector<64x6xf32>
    %4 = arith.maximumf %2, %3 : vector<64x6xf32>
    %5 = arith.truncf %4 : vector<64x6xf32> to vector<64x6xbf16>
    %c0_3 = arith.constant 0 : index
    %c0_4 = arith.constant 0 : index
    %6 = vector.load %arg2[%c0_3, %c0_4] : memref<6x8xbf16, #tpu.memory_space<vmem>>, vector<6x8xbf16>
    %cst_5 = arith.constant dense<0.000000e+00> : vector<64x8xf32>
    %7 = tpu.matmul %5, %6, %cst_5 {dimension_numbers = #tpu.dot_dimension_numbers<[1], [0], [0], [1], [0, 0, 1, 1], [], []>} : vector<64x6xbf16>, vector<6x8xbf16>, vector<64x8xf32> -> vector<64x8xf32>
    %c0_6 = arith.constant 0 : index
    %c0_7 = arith.constant 0 : index
    %8 = vector.load %arg3[%c0_6, %c0_7] : memref<1x8xf32, #tpu.memory_space<vmem>>, vector<1x8xf32>
    %9 = vector.shape_cast %8 : vector<1x8xf32> to vector<8xf32>
    %10 = vector.shape_cast %9 : vector<8xf32> to vector<1x8xf32>
    %11 = vector.broadcast %10 : vector<1x8xf32> to vector<64x8xf32>
    %12 = arith.mulf %7, %11 : vector<64x8xf32>
    %c0_8 = arith.constant 0 : index
    %c0_9 = arith.constant 0 : index
    %13 = vector.load %arg4[%c0_8, %c0_9] : memref<1x8xf32, #tpu.memory_space<vmem>>, vector<1x8xf32>
    %14 = vector.shape_cast %13 : vector<1x8xf32> to vector<8xf32>
    %15 = vector.shape_cast %14 : vector<8xf32> to vector<1x8xf32>
    %16 = vector.broadcast %15 : vector<1x8xf32> to vector<64x8xf32>
    %17 = arith.addf %12, %16 : vector<64x8xf32>
    %18 = arith.truncf %2 : vector<64x6xf32> to vector<64x6xbf16>
    %c0_10 = arith.constant 0 : index
    %c0_11 = arith.constant 0 : index
    %19 = vector.load %arg5[%c0_10, %c0_11] : memref<6x4xbf16, #tpu.memory_space<vmem>>, vector<6x4xbf16>
    %cst_12 = arith.constant dense<0.000000e+00> : vector<64x4xf32>
    %20 = tpu.matmul %18, %19, %cst_12 {dimension_numbers = #tpu.dot_dimension_numbers<[1], [0], [0], [1], [0, 0, 1, 1], [], []>} : vector<64x6xbf16>, vector<6x4xbf16>, vector<64x4xf32> -> vector<64x4xf32>
    %c0_13 = arith.constant 0 : index
    %c0_14 = arith.constant 0 : index
    %21 = vector.load %arg6[%c0_13, %c0_14] : memref<1x4xf32, #tpu.memory_space<vmem>>, vector<1x4xf32>
    %22 = vector.shape_cast %21 : vector<1x4xf32> to vector<4xf32>
    %23 = vector.shape_cast %22 : vector<4xf32> to vector<1x4xf32>
    %24 = vector.broadcast %23 : vector<1x4xf32> to vector<64x4xf32>
    %25 = arith.mulf %20, %24 : vector<64x4xf32>
    %c0_15 = arith.constant 0 : index
    %c0_16 = arith.constant 0 : index
    %26 = vector.load %arg7[%c0_15, %c0_16] : memref<1x4xf32, #tpu.memory_space<vmem>>, vector<1x4xf32>
    %27 = vector.shape_cast %26 : vector<1x4xf32> to vector<4xf32>
    %28 = vector.shape_cast %27 : vector<4xf32> to vector<1x4xf32>
    %29 = vector.broadcast %28 : vector<1x4xf32> to vector<64x4xf32>
    %30 = arith.addf %25, %29 : vector<64x4xf32>
    %31 = vector.shape_cast %17 : vector<64x8xf32> to vector<8x8x8xf32>
    %c0_17 = arith.constant 0 : index
    %c0_18 = arith.constant 0 : index
    %c0_19 = arith.constant 0 : index
    %c0_20 = arith.constant 0 : index
    %32 = vector.load %arg8[%c0_17, %c0_18, %c0_19, %c0_20] : memref<1x8x8x8xf32, #tpu.memory_space<vmem>>, vector<1x8x8x8xf32>
    %33 = vector.shape_cast %32 : vector<1x8x8x8xf32> to vector<8x8x8xf32>
    %34 = vector.shape_cast %31 : vector<8x8x8xf32> to vector<1x8x8x8xf32>
    tpu.vector_store %arg8[%c0_17, %c0_18, %c0_19, %c0_20], %34 {strides = array<i32>} : memref<1x8x8x8xf32, #tpu.memory_space<vmem>>, vector<1x8x8x8xf32>,
    %35 = vector.shape_cast %30 : vector<64x4xf32> to vector<8x8x4xf32>
    %c0_21 = arith.constant 0 : index
    %c0_22 = arith.constant 0 : index
    %c0_23 = arith.constant 0 : index
    %c0_24 = arith.constant 0 : index
    %36 = vector.load %arg9[%c0_21, %c0_22, %c0_23, %c0_24] : memref<1x8x8x4xf32, #tpu.memory_space<vmem>>, vector<1x8x8x4xf32>
    %37 = vector.shape_cast %36 : vector<1x8x8x4xf32> to vector<8x8x4xf32>
    %38 = vector.shape_cast %35 : vector<8x8x4xf32> to vector<1x8x8x4xf32>
    tpu.vector_store %arg9[%c0_21, %c0_22, %c0_23, %c0_24], %38 {strides = array<i32>} : memref<1x8x8x4xf32, #tpu.memory_space<vmem>>, vector<1x8x8x4xf32>,
    return
  }
  func.func @transform_0(%arg0: i32) -> (i32, i32, i32, i32) {
    %c0_i32 = arith.constant 0 : i32
    %c0_i32_0 = arith.constant 0 : i32
    %c0_i32_1 = arith.constant 0 : i32
    %c0_i32_2 = arith.constant 0 : i32
    return %arg0, %c0_i32, %c0_i32_0, %c0_i32_1 : i32, i32, i32, i32
  }
  func.func @transform_1(%arg0: i32) -> (i32, i32) {
    %c0_i32 = arith.constant 0 : i32
    %c0_i32_0 = arith.constant 0 : i32
    %c0_i32_1 = arith.constant 0 : i32
    return %c0_i32, %c0_i32_0 : i32, i32
  }
  func.func @transform_2(%arg0: i32) -> (i32, i32) {
    %c0_i32 = arith.constant 0 : i32
    %c0_i32_0 = arith.constant 0 : i32
    %c0_i32_1 = arith.constant 0 : i32
    return %c0_i32, %c0_i32_0 : i32, i32
  }
  func.func @transform_3(%arg0: i32) -> (i32, i32) {
    %c0_i32 = arith.constant 0 : i32
    %c0_i32_0 = arith.constant 0 : i32
    %c0_i32_1 = arith.constant 0 : i32
    return %c0_i32, %c0_i32_0 : i32, i32
  }
  func.func @transform_4(%arg0: i32) -> (i32, i32) {
    %c0_i32 = arith.constant 0 : i32
    %c0_i32_0 = arith.constant 0 : i32
    %c0_i32_1 = arith.constant 0 : i32
    return %c0_i32, %c0_i32_0 : i32, i32
  }
  func.func @transform_5(%arg0: i32) -> (i32, i32) {
    %c0_i32 = arith.constant 0 : i32
    %c0_i32_0 = arith.constant 0 : i32
    %c0_i32_1 = arith.constant 0 : i32
    return %c0_i32, %c0_i32_0 : i32, i32
  }
  func.func @transform_6(%arg0: i32) -> (i32, i32) {
    %c0_i32 = arith.constant 0 : i32
    %c0_i32_0 = arith.constant 0 : i32
    %c0_i32_1 = arith.constant 0 : i32
    return %c0_i32, %c0_i32_0 : i32, i32
  }
  func.func @transform_7(%arg0: i32) -> (i32, i32, i32, i32) {
    %c0_i32 = arith.constant 0 : i32
    %c0_i32_0 = arith.constant 0 : i32
    %c0_i32_1 = arith.constant 0 : i32
    %c0_i32_2 = arith.constant 0 : i32
    return %arg0, %c0_i32, %c0_i32_0, %c0_i32_1 : i32, i32, i32, i32
  }
  func.func @transform_8(%arg0: i32) -> (i32, i32, i32, i32) {
    %c0_i32 = arith.constant 0 : i32
    %c0_i32_0 = arith.constant 0 : i32
    %c0_i32_1 = arith.constant 0 : i32
    %c0_i32_2 = arith.constant 0 : i32
    return %arg0, %c0_i32, %c0_i32_0, %c0_i32_1 : i32, i32, i32, i32
  }
}

</mosaic_0001>

<llo_original>
// kernel: tpu_custom_call.1
$region0: #{tpu_custom_call.1}
  #allocation0 [shape = 'u32[]', space=smem, size = 0x4, offset = 0x4, fixed_abs, tag = 'smem constant byte address 0x4 - core index']
  #allocation1 [shape = 'u32[144,128]{1,0:T(1,128)}', space=vmem, size = 0x12000, scoped, tag = 'internal scratch']
  %s0 = inlined_call_operand.vmem [shape: f32[2,8,8,6], index: 0, kind: input, shape index: {}]
  %s1 = inlined_call_operand.vmem [shape: bf16[6,8], index: 1, kind: input, shape index: {}]
  %s2 = inlined_call_operand.vmem [shape: f32[1,8], index: 2, kind: input, shape index: {}]
  %s3 = inlined_call_operand.vmem [shape: f32[1,8], index: 3, kind: input, shape index: {}]
  %s4 = inlined_call_operand.vmem [shape: bf16[6,4], index: 4, kind: input, shape index: {}]
  %s5 = inlined_call_operand.vmem [shape: f32[1,4], index: 5, kind: input, shape index: {}]
  %s6 = inlined_call_operand.vmem [shape: f32[1,4], index: 6, kind: input, shape index: {}]
  %s7 = inlined_call_operand.hbm [shape: f32[2,8,8,8], index: 7, kind: output, shape index: {0}]
  %s8 = inlined_call_operand.vmem [shape: f32[2,8,8,4], index: 8, kind: output, shape index: {1}]
  %9 = xla_tuple %s7, %s8
  %s10 = sld [smem:[#allocation0]]
  $region69: #{tpu_custom_call.1} parent=0
    _
  %s12 = ssub.s32 1, %s10
  %s13 = scalar_select 0, %s12, %s10
  $region1: #{tpu_custom_call.1} parent=0
    #allocation2 [shape = 'u8[65536]{0}', space=vmem, size = 0x10000, scoped, tag = 'output window, operand 0']
    #allocation3 [shape = 's32[2]{0}', space=sflag, size = 0x8, scoped, tag = 'scoped memory for tpu_custom_call.1']
    %14 = vsyncpa [#allocation3], 0
    %s15 = scalar_lea.sflag [#allocation3], 1
    %16 = vsyncpa %s15, 0
    loop: start=0, step=1, limit=4
    $region2: #{tpu_custom_call.1} parent=1 // loop_pre_header
      _
    $region3: #{tpu_custom_call.1} parent=1 // loop_header
      %s18 = sphi 0, %s22
      %p19 = scmp.ge.s32.totalorder %s18, 4
      %s28 = sphi 0, %s30
      %s31 = sphi 0, %s28
      %s32 = sphi 0, %s31
      %s48 = sphi 0, %s32
      %s52 = sphi 0, %s52
      %s54 = sphi 0, %s52
      %s55 = sphi 0, %s54
      %s69 = sphi 0, %s55
      %s73 = sphi 0, %s73
      %s75 = sphi 0, %s73
      %s76 = sphi 0, %s75
      %s90 = sphi 0, %s76
      %s94 = sphi 0, %s94
      %s96 = sphi 0, %s94
      %s97 = sphi 0, %s96
      %s111 = sphi 0, %s97
      %s115 = sphi 0, %s115
      %s117 = sphi 0, %s115
      %s118 = sphi 0, %s117
      %s132 = sphi 0, %s118
      %s136 = sphi 0, %s136
      %s138 = sphi 0, %s136
      %s139 = sphi 0, %s138
      %s153 = sphi 0, %s139
      %s157 = sphi 0, %s157
      %s159 = sphi 0, %s157
      %s160 = sphi 0, %s159
      %s174 = sphi 0, %s160
      %s180 = sphi 0, %s182
      %s183 = sphi 0, %s180
      %s184 = sphi 0, %s183
      %s200 = sphi 0, %s184
      %s206 = sphi 0, %s208
      %s209 = sphi 0, %s206
      %s210 = sphi 0, %s209
      %s226 = sphi 0, %s210
    $region4: #{tpu_custom_call.1} parent=1 // loop_header_branch
      %21 = sbr.rel (%p19) target = $region8
    $region5: #{tpu_custom_call.1} parent=1 // loop_body
      %s23 = ssub.s32 %s18, 1
      %s24 = ssub.s32 %s18, 2
      %s25 = sadd.s32 %s18, 1
      %s26 = ssub.s32 %s18, %s25
      %p27 = scmp.eq.s32.totalorder %s26, 0
      %s29 = sadd.s32 %s28, 1
      %s30 = scalar_select %p27, %s28, %s29
      %p33 = pneg %p27
      %p34 = scmp.eq.s32.totalorder %s18, 1
      %p35 = por %p33, %p34
      %p36 = scmp.ne.s32.totalorder %s28, %s31
      %p37 = scmp.eq.s32.totalorder %s18, 0
      %p38 = por %p36, %p37
      %p39 = scmp.ne.s32.totalorder %s28, %s31
      %p40 = scmp.eq.s32.totalorder %s23, 1
      %p41 = por %p39, %p40
      %p42 = scmp.ne.s32.totalorder %s31, %s32
      %p43 = scmp.eq.s32.totalorder %s23, 0
      %p44 = por %p42, %p43
      %p45 = scmp.ne.s32.totalorder %s31, %s32
      %p46 = scmp.eq.s32.totalorder %s24, 1
      %p47 = por %p45, %p46
      %p49 = scmp.ne.s32.totalorder %s32, %s48
      %p50 = scmp.eq.s32.totalorder %s24, 0
      %p51 = por %p49, %p50
      %s53 = sadd.s32 %s52, 1
      %p56 = scmp.eq.s32.totalorder %s18, 1
      %p57 = scmp.ne.s32.totalorder %s52, %s54
      %p58 = scmp.eq.s32.totalorder %s18, 0
      %p59 = por %p57, %p58
      %p60 = scmp.ne.s32.totalorder %s52, %s54
      %p61 = scmp.eq.s32.totalorder %s23, 1
      %p62 = por %p60, %p61
      %p63 = scmp.ne.s32.totalorder %s54, %s55
      %p64 = scmp.eq.s32.totalorder %s23, 0
      %p65 = por %p63, %p64
      %p66 = scmp.ne.s32.totalorder %s54, %s55
      %p67 = scmp.eq.s32.totalorder %s24, 1
      %p68 = por %p66, %p67
      %p70 = scmp.ne.s32.totalorder %s55, %s69
      %p71 = scmp.eq.s32.totalorder %s24, 0
      %p72 = por %p70, %p71
      %s74 = sadd.s32 %s73, 1
      %p77 = scmp.eq.s32.totalorder %s18, 1
      %p78 = scmp.ne.s32.totalorder %s73, %s75
      %p79 = scmp.eq.s32.totalorder %s18, 0
      %p80 = por %p78, %p79
      %p81 = scmp.ne.s32.totalorder %s73, %s75
      %p82 = scmp.eq.s32.totalorder %s23, 1
      %p83 = por %p81, %p82
      %p84 = scmp.ne.s32.totalorder %s75, %s76
      %p85 = scmp.eq.s32.totalorder %s23, 0
      %p86 = por %p84, %p85
      %p87 = scmp.ne.s32.totalorder %s75, %s76
      %p88 = scmp.eq.s32.totalorder %s24, 1
      %p89 = por %p87, %p88
      %p91 = scmp.ne.s32.totalorder %s76, %s90
      %p92 = scmp.eq.s32.totalorder %s24, 0
      %p93 = por %p91, %p92
      %s95 = sadd.s32 %s94, 1
      %p98 = scmp.eq.s32.totalorder %s18, 1
      %p99 = scmp.ne.s32.totalorder %s94, %s96
      %p100 = scmp.eq.s32.totalorder %s18, 0
      %p101 = por %p99, %p100
      %p102 = scmp.ne.s32.totalorder %s94, %s96
      %p103 = scmp.eq.s32.totalorder %s23, 1
      %p104 = por %p102, %p103
      %p105 = scmp.ne.s32.totalorder %s96, %s97
      %p106 = scmp.eq.s32.totalorder %s23, 0
      %p107 = por %p105, %p106
      %p108 = scmp.ne.s32.totalorder %s96, %s97
      %p109 = scmp.eq.s32.totalorder %s24, 1
      %p110 = por %p108, %p109
      %p112 = scmp.ne.s32.totalorder %s97, %s111
      %p113 = scmp.eq.s32.totalorder %s24, 0
      %p114 = por %p112, %p113
      %s116 = sadd.s32 %s115, 1
      %p119 = scmp.eq.s32.totalorder %s18, 1
      %p120 = scmp.ne.s32.totalorder %s115, %s117
      %p121 = scmp.eq.s32.totalorder %s18, 0
      %p122 = por %p120, %p121
      %p123 = scmp.ne.s32.totalorder %s115, %s117
      %p124 = scmp.eq.s32.totalorder %s23, 1
      %p125 = por %p123, %p124
      %p126 = scmp.ne.s32.totalorder %s117, %s118
      %p127 = scmp.eq.s32.totalorder %s23, 0
      %p128 = por %p126, %p127
      %p129 = scmp.ne.s32.totalorder %s117, %s118
      %p130 = scmp.eq.s32.totalorder %s24, 1
      %p131 = por %p129, %p130
      %p133 = scmp.ne.s32.totalorder %s118, %s132
      %p134 = scmp.eq.s32.totalorder %s24, 0
      %p135 = por %p133, %p134
      %s137 = sadd.s32 %s136, 1
      %p140 = scmp.eq.s32.totalorder %s18, 1
      %p141 = scmp.ne.s32.totalorder %s136, %s138
      %p142 = scmp.eq.s32.totalorder %s18, 0
      %p143 = por %p141, %p142
      %p144 = scmp.ne.s32.totalorder %s136, %s138
      %p145 = scmp.eq.s32.totalorder %s23, 1
      %p146 = por %p144, %p145
      %p147 = scmp.ne.s32.totalorder %s138, %s139
      %p148 = scmp.eq.s32.totalorder %s23, 0
      %p149 = por %p147, %p148
      %p150 = scmp.ne.s32.totalorder %s138, %s139
      %p151 = scmp.eq.s32.totalorder %s24, 1
      %p152 = por %p150, %p151
      %p154 = scmp.ne.s32.totalorder %s139, %s153
      %p155 = scmp.eq.s32.totalorder %s24, 0
      %p156 = por %p154, %p155
      %s158 = sadd.s32 %s157, 1
      %p161 = scmp.eq.s32.totalorder %s18, 1
      %p162 = scmp.ne.s32.totalorder %s157, %s159
      %p163 = scmp.eq.s32.totalorder %s18, 0
      %p164 = por %p162, %p163
      %p165 = scmp.ne.s32.totalorder %s157, %s159
      %p166 = scmp.eq.s32.totalorder %s23, 1
      %p167 = por %p165, %p166
      %p168 = scmp.ne.s32.totalorder %s159, %s160
      %p169 = scmp.eq.s32.totalorder %s23, 0
      %p170 = por %p168, %p169
      %p171 = scmp.ne.s32.totalorder %s159, %s160
      %p172 = scmp.eq.s32.totalorder %s24, 1
      %p173 = por %p171, %p172
      %p175 = scmp.ne.s32.totalorder %s160, %s174
      %p176 = scmp.eq.s32.totalorder %s24, 0
      %p177 = por %p175, %p176
      %s178 = ssub.s32 %s18, %s25
      %p179 = scmp.eq.s32.totalorder %s178, 0
      %s181 = sadd.s32 %s180, 1
      %s182 = scalar_select %p179, %s180, %s181
      %p185 = pneg %p179
      %p186 = scmp.eq.s32.totalorder %s18, 1
      %p187 = por %p185, %p186
      %p188 = scmp.ne.s32.totalorder %s180, %s183
      %p189 = scmp.eq.s32.totalorder %s18, 0
      %p190 = por %p188, %p189
      %p191 = scmp.ne.s32.totalorder %s180, %s183
      %p192 = scmp.eq.s32.totalorder %s23, 1
      %p193 = por %p191, %p192
      %p194 = scmp.ne.s32.totalorder %s183, %s184
      %p195 = scmp.eq.s32.totalorder %s23, 0
      %p196 = por %p194, %p195
      %p197 = scmp.ne.s32.totalorder %s183, %s184
      %p198 = scmp.eq.s32.totalorder %s24, 1
      %p199 = por %p197, %p198
      %p201 = scmp.ne.s32.totalorder %s184, %s200
      %p202 = scmp.eq.s32.totalorder %s24, 0
      %p203 = por %p201, %p202
      %s204 = ssub.s32 %s18, %s25
      %p205 = scmp.eq.s32.totalorder %s204, 0
      %s207 = sadd.s32 %s206, 1
      %s208 = scalar_select %p205, %s206, %s207
      %p211 = pneg %p205
      %p212 = scmp.eq.s32.totalorder %s18, 1
      %p213 = por %p211, %p212
      %p214 = scmp.ne.s32.totalorder %s206, %s209
      %p215 = scmp.eq.s32.totalorder %s18, 0
      %p216 = por %p214, %p215
      %p217 = scmp.ne.s32.totalorder %s206, %s209
      %p218 = scmp.eq.s32.totalorder %s23, 1
      %p219 = por %p217, %p218
      %p220 = scmp.ne.s32.totalorder %s209, %s210
      %p221 = scmp.eq.s32.totalorder %s23, 0
      %p222 = por %p220, %p221
      %p223 = scmp.ne.s32.totalorder %s209, %s210
      %p224 = scmp.eq.s32.totalorder %s24, 1
      %p225 = por %p223, %p224
      %p227 = scmp.ne.s32.totalorder %s210, %s226
      %p228 = scmp.eq.s32.totalorder %s24, 0
      %p229 = por %p227, %p228
      %p230 = scmp.le.s32.totalorder 1, %s18
      %p231 = scmp.lt.s32.totalorder %s18, 3
      %p232 = pnand %p230, %p231
      %p233 = pneg %p232
      // Predicated region
      $region9: #{tpu_custom_call.1} parent=5 // pred_check
        _
      $region10: #{tpu_custom_call.1} parent=5 // pred_check_branch
        %235 = sbr.rel (%p232) target = $region12
      $region11: #{tpu_custom_call.1} parent=5 // pred_region
        %s236 = ssub.s32 %s18, 1
        // Predicated region
        $region13: #{tpu_custom_call.1} parent=11 // pred_check
          %p237 = pneg %p65
        $region14: #{tpu_custom_call.1} parent=11 // pred_check_branch
          %239 = sbr.rel (%p237) target = $region16
        $region15: #{tpu_custom_call.1} parent=11 // pred_region
          _
        $region16: #{tpu_custom_call.1} parent=11 // pred_fallthru
          _
        // Predicated region
        $region17: #{tpu_custom_call.1} parent=11 // pred_check
          %p240 = pneg %p86
        $region18: #{tpu_custom_call.1} parent=11 // pred_check_branch
          %242 = sbr.rel (%p240) target = $region20
        $region19: #{tpu_custom_call.1} parent=11 // pred_region
          _
        $region20: #{tpu_custom_call.1} parent=11 // pred_fallthru
          _
        // Predicated region
        $region21: #{tpu_custom_call.1} parent=11 // pred_check
          %p243 = pneg %p107
        $region22: #{tpu_custom_call.1} parent=11 // pred_check_branch
          %245 = sbr.rel (%p243) target = $region24
        $region23: #{tpu_custom_call.1} parent=11 // pred_region
          _
        $region24: #{tpu_custom_call.1} parent=11 // pred_fallthru
          _
        // Predicated region
        $region25: #{tpu_custom_call.1} parent=11 // pred_check
          %p246 = pneg %p128
        $region26: #{tpu_custom_call.1} parent=11 // pred_check_branch
          %248 = sbr.rel (%p246) target = $region28
        $region27: #{tpu_custom_call.1} parent=11 // pred_region
          _
        $region28: #{tpu_custom_call.1} parent=11 // pred_fallthru
          _
        // Predicated region
        $region29: #{tpu_custom_call.1} parent=11 // pred_check
          %p249 = pneg %p149
        $region30: #{tpu_custom_call.1} parent=11 // pred_check_branch
          %251 = sbr.rel (%p249) target = $region32
        $region31: #{tpu_custom_call.1} parent=11 // pred_region
          _
        $region32: #{tpu_custom_call.1} parent=11 // pred_fallthru
          _
        // Predicated region
        $region33: #{tpu_custom_call.1} parent=11 // pred_check
          %p252 = pneg %p170
        $region34: #{tpu_custom_call.1} parent=11 // pred_check_branch
          %254 = sbr.rel (%p252) target = $region36
        $region35: #{tpu_custom_call.1} parent=11 // pred_region
          _
        $region36: #{tpu_custom_call.1} parent=11 // pred_fallthru
          _
      $region12: #{tpu_custom_call.1} parent=5 // pred_fallthru
        _
      %p255 = scmp.lt.s32.totalorder %s18, 2
      // Predicated region
      $region37: #{tpu_custom_call.1} parent=5 // pred_check
        %p256 = pneg %p255
      $region38: #{tpu_custom_call.1} parent=5 // pred_check_branch
        %258 = sbr.rel (%p256) target = $region40
      $region39: #{tpu_custom_call.1} parent=5 // pred_region
        // Predicated region
        $region41: #{tpu_custom_call.1} parent=39 // pred_check
          %p259 = pneg %p38
        $region42: #{tpu_custom_call.1} parent=39 // pred_check_branch
          %261 = sbr.rel (%p259) target = $region44
        $region43: #{tpu_custom_call.1} parent=39 // pred_region
          %p262 = scmp.lt.s32.totalorder %s18, 1
          %s263 = scalar_select %p262, %s18, 1
          %s264 = smul.addr %s263, 8
          %s265 = smul.addr %s264, 8
          %s266 = scalar_lea.vmem %s0, %s265
        $region44: #{tpu_custom_call.1} parent=39 // pred_fallthru
          _
      $region40: #{tpu_custom_call.1} parent=5 // pred_fallthru
        _
      %p267 = scmp.le.s32.totalorder 1, %s18
      %p268 = scmp.lt.s32.totalorder %s18, 3
      %p269 = pnand %p267, %p268
      %p270 = pneg %p269
      // Predicated region
      $region45: #{tpu_custom_call.1} parent=5 // pred_check
        _
      $region46: #{tpu_custom_call.1} parent=5 // pred_check_branch
        %272 = sbr.rel (%p269) target = $region48
      $region47: #{tpu_custom_call.1} parent=5 // pred_region
        %s273 = ssub.s32 %s18, 1
        %p274 = scmp.lt.s32.totalorder %s23, 1
        %s275 = scalar_select %p274, %s23, 1
        %s276 = smul.addr %s275, 8
        %s277 = smul.addr %s276, 8
        %s278 = scalar_lea.vmem %s0, %s277
        %p279 = pneg %p44
        %p280 = pneg %p41
        %p281 = pneg %p65
        %p282 = pneg %p62
        %p283 = pneg %p86
        %p284 = pneg %p83
        %p285 = pneg %p107
        %p286 = pneg %p104
        %p287 = pneg %p128
        %p288 = pneg %p125
        %p289 = pneg %p149
        %p290 = pneg %p146
        %p291 = pneg %p170
        %p292 = pneg %p167
        %p293 = pneg %p196
        %p294 = pneg %p193
        %s295 = sand.u32 %s183, 1
        %s296 = scalar_lea.sflag [#allocation3], %s295
        %s297 = sand.u32 %s183, 1
        %s298 = smul.addr %s297, 64
        %s299 = scalar_lea.vmem [#allocation2], %s298
        %p300 = pneg %p222
        %p301 = pneg %p219
        %p302 = scmp.lt.s32.totalorder %s23, 1
        %s303 = scalar_select %p302, %s23, 1
        %s304 = smul.addr %s303, 8
        %s305 = smul.addr %s304, 8
        %s306 = scalar_lea.vmem %s8, %s305
        %p307 = scmp.lt.s32.totalorder %s23, 1
        %s308 = scalar_select %p307, %s23, 1
        %s309 = smul.addr %s308, 8
        %s310 = smul.addr %s309, 8
        %s311 = scalar_lea.vmem %s0, %s310
        %p312 = scmp.lt.s32.totalorder %s23, 1
        %s313 = scalar_select %p312, %s23, 1
        %s314 = smul.addr %s313, 8
        %s315 = smul.addr %s314, 8
        %s316 = scalar_lea.vmem %s8, %s315
        %v318 = vld [vmem:[%s311] sm:$0xff]
        %v319 = vld [vmem:[%s311 + $0x8] sm:$0xff]
        %v320 = vld [vmem:[%s311 + $0x10] sm:$0xff]
        %v321 = vld [vmem:[%s311 + $0x18] sm:$0xff]
        %v322 = vld [vmem:[%s311 + $0x20] sm:$0xff]
        %v323 = vld [vmem:[%s311 + $0x28] sm:$0xff]
        %v324 = vld [vmem:[%s311 + $0x30] sm:$0xff]
        %v325 = vld [vmem:[%s311 + $0x38] sm:$0xff]
        %v326 = vmax.f32 %v318, 0.0
        %v327 = vmax.f32 %v319, 0.0
        %v328 = vmax.f32 %v320, 0.0
        %v329 = vmax.f32 %v321, 0.0
        %v330 = vmax.f32 %v322, 0.0
        %v331 = vmax.f32 %v323, 0.0
        %v332 = vmax.f32 %v324, 0.0
        %v333 = vmax.f32 %v325, 0.0
        %v334 = vpack.c.bf16 %v327, %v326
        %v335 = vpack.c.bf16 %v329, %v328
        %v336 = vpack.c.bf16 %v331, %v330
        %v337 = vpack.c.bf16 %v333, %v332
        %v338 = vld [vmem:[%s1] sm:$0x7]
        %vm339 = vcmask 48128
        %v341 = vsel %vm339, %v334, 0
        %v344 = vsel %vm339, %v335, 0
        %v347 = vsel %vm339, %v336, 0
        %v350 = vsel %vm339, %v337, 0
        %vm352 = vcmask 1042432
        %v354 = vsel %vm352, %v338, 0
        %356 = vmatprep.subr.bf16.mxu0 0
        %357 = vmatpush1.bf16.msra.mxu0 %v354
        %358 = vmatprep.subr.bf16.mxu0 0
        %359 = vmatpush1.bf16.msra.mxu0 0
        %360 = vmatprep.subr.bf16.mxu0 0
        %361 = vmatpush1.bf16.msra.mxu0 0
        %362 = vmatprep.subr.bf16.mxu0 0
        %363 = vmatpush1.bf16.msra.mxu0 0
        %364 = vmatprep.subr.bf16.mxu0 0
        %365 = vmatpush1.bf16.msra.mxu0 0
        %366 = vmatprep.subr.bf16.mxu0 0
        %367 = vmatpush1.bf16.msra.mxu0 0
        %368 = vmatprep.subr.bf16.mxu0 0
        %369 = vmatpush1.bf16.msra.mxu0 0
        %370 = vmatprep.subr.bf16.mxu0 0
        %371 = vmatpush1.bf16.msra.mxu0 0
        %372 = vmatprep.subr.bf16.mxu0 0
        %373 = vmatpush1.bf16.msra.mxu0 0
        %374 = vmatprep.subr.bf16.mxu0 0
        %375 = vmatpush1.bf16.msra.mxu0 0
        %376 = vmatprep.subr.bf16.mxu0 0
        %377 = vmatpush1.bf16.msra.mxu0 0
        %378 = vmatprep.subr.bf16.mxu0 0
        %379 = vmatpush1.bf16.msra.mxu0 0
        %380 = vmatprep.subr.bf16.mxu0 0
        %381 = vmatpush1.bf16.msra.mxu0 0
        %382 = vmatprep.subr.bf16.mxu0 0
        %383 = vmatpush1.bf16.msra.mxu0 0
        %384 = vmatprep.subr.bf16.mxu0 0
        %385 = vmatpush1.bf16.msra.mxu0 0
        %386 = vmatprep.subr.bf16.mxu0 0
        %387 = vmatpush1.bf16.msra.mxu0 0
        %388 = vmatprep.mubr.bf16.mxu0 0
        %389 = vmatmul.mubr.bf16.gmra.mrb[0].mxu0 %v341
        %v390 = vpop.f32.mrb[0].mxu0
        %v391 = vadd.f32 0.0, %v390
        %v392 = vpop.f32.mrb[0].mxu0
        %v393 = vpop.f32.mrb[0].mxu0
        %v394 = vadd.f32 0.0, %v393
        %v395 = vpop.f32.mrb[0].mxu0
        %396 = vmatprep.mubr.bf16.mxu0 0
        %397 = vmatmul.mubr.bf16.gmra.mrb[0].mxu0 %v344
        %v398 = vpop.f32.mrb[0].mxu0
        %v399 = vadd.f32 0.0, %v398
        %v400 = vpop.f32.mrb[0].mxu0
        %v401 = vpop.f32.mrb[0].mxu0
        %v402 = vadd.f32 0.0, %v401
        %v403 = vpop.f32.mrb[0].mxu0
        %404 = vmatprep.mubr.bf16.mxu0 0
        %405 = vmatmul.mubr.bf16.gmra.mrb[0].mxu0 %v347
        %v406 = vpop.f32.mrb[0].mxu0
        %v407 = vadd.f32 0.0, %v406
        %v408 = vpop.f32.mrb[0].mxu0
        %v409 = vpop.f32.mrb[0].mxu0
        %v410 = vadd.f32 0.0, %v409
        %v411 = vpop.f32.mrb[0].mxu0
        %412 = vmatprep.mubr.bf16.mxu0 0
        %413 = vmatmul.mubr.bf16.gmra.mrb[0].mxu0 %v350
        %v414 = vpop.f32.mrb[0].mxu0
        %v415 = vadd.f32 0.0, %v414
        %v416 = vpop.f32.mrb[0].mxu0
        %v417 = vpop.f32.mrb[0].mxu0
        %v418 = vadd.f32 0.0, %v417
        %v419 = vpop.f32.mrb[0].mxu0
        %420 = vdwg.mxu0
        %v421 = vld [vmem:[%s2] sm:$0x1]
        %v423 = vlaneseq
        %v424 = vshrl.u32 %v423, 7
        %v425 = vsub.s32 0, %v424
        %v426 = vrot.slane %v421, %v425
        %v428 = vmul.f32 %v391, %v426
        %v429 = vmul.f32 %v394, %v426
        %v430 = vmul.f32 %v399, %v426
        %v431 = vmul.f32 %v402, %v426
        %v432 = vmul.f32 %v407, %v426
        %v433 = vmul.f32 %v410, %v426
        %v434 = vmul.f32 %v415, %v426
        %v435 = vmul.f32 %v418, %v426
        %v436 = vld [vmem:[%s3] sm:$0x1]
        %v438 = vlaneseq
        %v439 = vshrl.u32 %v438, 7
        %v440 = vsub.s32 0, %v439
        %v441 = vrot.slane %v436, %v440
        %v443 = vadd.f32 %v428, %v441
        %v444 = vadd.f32 %v429, %v441
        %v445 = vadd.f32 %v430, %v441
        %v446 = vadd.f32 %v431, %v441
        %v447 = vadd.f32 %v432, %v441
        %v448 = vadd.f32 %v433, %v441
        %v449 = vadd.f32 %v434, %v441
        %v450 = vadd.f32 %v435, %v441
        %v451 = vpack.c.bf16 %v319, %v318
        %v452 = vpack.c.bf16 %v321, %v320
        %v453 = vpack.c.bf16 %v323, %v322
        %v454 = vpack.c.bf16 %v325, %v324
        %v455 = vld [vmem:[%s4] sm:$0x7]
        %v457 = vsel %vm339, %v451, 0
        %v460 = vsel %vm339, %v452, 0
        %v463 = vsel %vm339, %v453, 0
        %v466 = vsel %vm339, %v454, 0
        %v469 = vsel %vm352, %v455, 0
        %471 = vmatprep.subr.bf16.mxu0 0
        %472 = vmatpush1.bf16.msra.mxu0 %v469
        %473 = vmatprep.subr.bf16.mxu0 0
        %474 = vmatpush1.bf16.msra.mxu0 0
        %475 = vmatprep.subr.bf16.mxu0 0
        %476 = vmatpush1.bf16.msra.mxu0 0
        %477 = vmatprep.subr.bf16.mxu0 0
        %478 = vmatpush1.bf16.msra.mxu0 0
        %479 = vmatprep.subr.bf16.mxu0 0
        %480 = vmatpush1.bf16.msra.mxu0 0
        %481 = vmatprep.subr.bf16.mxu0 0
        %482 = vmatpush1.bf16.msra.mxu0 0
        %483 = vmatprep.subr.bf16.mxu0 0
        %484 = vmatpush1.bf16.msra.mxu0 0
        %485 = vmatprep.subr.bf16.mxu0 0
        %486 = vmatpush1.bf16.msra.mxu0 0
        %487 = vmatprep.subr.bf16.mxu0 0
        %488 = vmatpush1.bf16.msra.mxu0 0
        %489 = vmatprep.subr.bf16.mxu0 0
        %490 = vmatpush1.bf16.msra.mxu0 0
        %491 = vmatprep.subr.bf16.mxu0 0
        %492 = vmatpush1.bf16.msra.mxu0 0
        %493 = vmatprep.subr.bf16.mxu0 0
        %494 = vmatpush1.bf16.msra.mxu0 0
        %495 = vmatprep.subr.bf16.mxu0 0
        %496 = vmatpush1.bf16.msra.mxu0 0
        %497 = vmatprep.subr.bf16.mxu0 0
        %498 = vmatpush1.bf16.msra.mxu0 0
        %499 = vmatprep.subr.bf16.mxu0 0
        %500 = vmatpush1.bf16.msra.mxu0 0
        %501 = vmatprep.subr.bf16.mxu0 0
        %502 = vmatpush1.bf16.msra.mxu0 0
        %503 = vmatprep.mubr.bf16.mxu0 0
        %504 = vmatmul.mubr.bf16.gmra.mrb[0].mxu0 %v457
        %v505 = vpop.f32.mrb[0].mxu0
        %v506 = vadd.f32 0.0, %v505
        %v507 = vpop.f32.mrb[0].mxu0
        %v508 = vpop.f32.mrb[0].mxu0
        %v509 = vadd.f32 0.0, %v508
        %v510 = vpop.f32.mrb[0].mxu0
        %511 = vmatprep.mubr.bf16.mxu0 0
        %512 = vmatmul.mubr.bf16.gmra.mrb[0].mxu0 %v460
        %v513 = vpop.f32.mrb[0].mxu0
        %v514 = vadd.f32 0.0, %v513
        %v515 = vpop.f32.mrb[0].mxu0
        %v516 = vpop.f32.mrb[0].mxu0
        %v517 = vadd.f32 0.0, %v516
        %v518 = vpop.f32.mrb[0].mxu0
        %519 = vmatprep.mubr.bf16.mxu0 0
        %520 = vmatmul.mubr.bf16.gmra.mrb[0].mxu0 %v463
        %v521 = vpop.f32.mrb[0].mxu0
        %v522 = vadd.f32 0.0, %v521
        %v523 = vpop.f32.mrb[0].mxu0
        %v524 = vpop.f32.mrb[0].mxu0
        %v525 = vadd.f32 0.0, %v524
        %v526 = vpop.f32.mrb[0].mxu0
        %527 = vmatprep.mubr.bf16.mxu0 0
        %528 = vmatmul.mubr.bf16.gmra.mrb[0].mxu0 %v466
        %v529 = vpop.f32.mrb[0].mxu0
        %v530 = vadd.f32 0.0, %v529
        %v531 = vpop.f32.mrb[0].mxu0
        %v532 = vpop.f32.mrb[0].mxu0
        %v533 = vadd.f32 0.0, %v532
        %v534 = vpop.f32.mrb[0].mxu0
        %535 = vdwg.mxu0
        %v536 = vld [vmem:[%s5] sm:$0x1]
        %v538 = vlaneseq
        %v539 = vshrl.u32 %v538, 7
        %v540 = vsub.s32 0, %v539
        %v541 = vrot.slane %v536, %v540
        %v543 = vmul.f32 %v506, %v541
        %v544 = vmul.f32 %v509, %v541
        %v545 = vmul.f32 %v514, %v541
        %v546 = vmul.f32 %v517, %v541
        %v547 = vmul.f32 %v522, %v541
        %v548 = vmul.f32 %v525, %v541
        %v549 = vmul.f32 %v530, %v541
        %v550 = vmul.f32 %v533, %v541
        %v551 = vld [vmem:[%s6] sm:$0x1]
        %v553 = vlaneseq
        %v554 = vshrl.u32 %v553, 7
        %v555 = vsub.s32 0, %v554
        %v556 = vrot.slane %v551, %v555
        %v558 = vadd.f32 %v543, %v556
        %v559 = vadd.f32 %v544, %v556
        %v560 = vadd.f32 %v545, %v556
        %v561 = vadd.f32 %v546, %v556
        %v562 = vadd.f32 %v547, %v556
        %v563 = vadd.f32 %v548, %v556
        %v564 = vadd.f32 %v549, %v556
        %v565 = vadd.f32 %v550, %v556
        %vm566 = vcmask 64512
        %567 = vst.msk [vmem:[%s299] sm:$0xff] %vm566, %v443
        %568 = vst.msk [vmem:[%s299 + $0x8] sm:$0xff] %vm566, %v444
        %569 = vst.msk [vmem:[%s299 + $0x10] sm:$0xff] %vm566, %v445
        %570 = vst.msk [vmem:[%s299 + $0x18] sm:$0xff] %vm566, %v446
        %571 = vst.msk [vmem:[%s299 + $0x20] sm:$0xff] %vm566, %v447
        %572 = vst.msk [vmem:[%s299 + $0x28] sm:$0xff] %vm566, %v448
        %573 = vst.msk [vmem:[%s299 + $0x30] sm:$0xff] %vm566, %v449
        %574 = vst.msk [vmem:[%s299 + $0x38] sm:$0xff] %vm566, %v450
        %vm575 = vcmask 31744
        %576 = vst.msk [vmem:[%s316] sm:$0xff] %vm575, %v558
        %577 = vst.msk [vmem:[%s316 + $0x8] sm:$0xff] %vm575, %v559
        %578 = vst.msk [vmem:[%s316 + $0x10] sm:$0xff] %vm575, %v560
        %579 = vst.msk [vmem:[%s316 + $0x18] sm:$0xff] %vm575, %v561
        %580 = vst.msk [vmem:[%s316 + $0x20] sm:$0xff] %vm575, %v562
        %581 = vst.msk [vmem:[%s316 + $0x28] sm:$0xff] %vm575, %v563
        %582 = vst.msk [vmem:[%s316 + $0x30] sm:$0xff] %vm575, %v564
        %583 = vst.msk [vmem:[%s316 + $0x38] sm:$0xff] %vm575, %v565
        %s584 = sand.u32 %s183, 1
        %s585 = scalar_lea.sflag [#allocation3], %s584
        %s586 = sand.u32 %s183, 1
        %s587 = smul.addr %s586, 64
        %s588 = scalar_lea.vmem [#allocation2], %s587
        %p589 = scmp.lt.s32.totalorder %s23, 1
        %s590 = scalar_select %p589, %s23, 1
        %s591 = smul.addr %s590, 8
        %s592 = smul.addr %s591, 8
        %s593 = scalar_lea.vmem %s8, %s592
        // Predicated region
        $region49: #{tpu_custom_call.1} parent=47 // pred_check
          %p594 = pneg %p193
        $region50: #{tpu_custom_call.1} parent=47 // pred_check_branch
          %596 = sbr.rel (%p594) target = $region52
        $region51: #{tpu_custom_call.1} parent=47 // pred_region
          %s598 = ssub.s32 1024, 1024
          %599 = vsyncadd %s585, %s598
          %s600 = smul.addr %s23, 8
          %s601 = smul.addr %s600, 128
          %s602 = scalar_lea.hbm %s7, %s601
          %s603 = sshll.u32 %s588, 4
          %s604 = int_to_ptr.vmem [resolvable:$true] %s603
          %609 = dma.vmem_to_hbm [thread:$0]  %s604, 1024, %s602, %s585, 128, 128, 8
        $region52: #{tpu_custom_call.1} parent=47 // pred_fallthru
          _
        // Predicated region
        $region53: #{tpu_custom_call.1} parent=47 // pred_check
          %p610 = pneg %p219
        $region54: #{tpu_custom_call.1} parent=47 // pred_check_branch
          %612 = sbr.rel (%p610) target = $region56
        $region55: #{tpu_custom_call.1} parent=47 // pred_region
          _
        $region56: #{tpu_custom_call.1} parent=47 // pred_fallthru
          _
      $region48: #{tpu_custom_call.1} parent=5 // pred_fallthru
        _
      %p613 = scmp.le.s32.totalorder 2, %s18
      // Predicated region
      $region57: #{tpu_custom_call.1} parent=5 // pred_check
        %p614 = pneg %p613
      $region58: #{tpu_custom_call.1} parent=5 // pred_check_branch
        %616 = sbr.rel (%p614) target = $region60
      $region59: #{tpu_custom_call.1} parent=5 // pred_region
        %s617 = ssub.s32 %s18, 2
        // Predicated region
        $region61: #{tpu_custom_call.1} parent=59 // pred_check
          %p618 = pneg %p199
        $region62: #{tpu_custom_call.1} parent=59 // pred_check_branch
          %620 = sbr.rel (%p618) target = $region64
        $region63: #{tpu_custom_call.1} parent=59 // pred_region
          %s621 = sand.u32 %s184, 1
          %s622 = scalar_lea.sflag [#allocation3], %s621
          %s623 = sand.u32 %s184, 1
          %s624 = smul.addr %s623, 64
          %s625 = scalar_lea.vmem [#allocation2], %s624
          %626 = dma.done %s622, 1024
        $region64: #{tpu_custom_call.1} parent=59 // pred_fallthru
          _
        // Predicated region
        $region65: #{tpu_custom_call.1} parent=59 // pred_check
          %p627 = pneg %p225
        $region66: #{tpu_custom_call.1} parent=59 // pred_check_branch
          %629 = sbr.rel (%p627) target = $region68
        $region67: #{tpu_custom_call.1} parent=59 // pred_region
          %p630 = scmp.lt.s32.totalorder %s24, 1
          %s631 = scalar_select %p630, %s24, 1
          %s632 = smul.addr %s631, 8
          %s633 = smul.addr %s632, 8
          %s634 = scalar_lea.vmem %s8, %s633
        $region68: #{tpu_custom_call.1} parent=59 // pred_fallthru
          _
      $region60: #{tpu_custom_call.1} parent=5 // pred_fallthru
        _
    $region6: #{tpu_custom_call.1} parent=1 // loop_footer
      %s22 = sadd.s32 1, %s18
    $region7: #{tpu_custom_call.1} parent=1 // loop_footer_branch
      %17 = sbr.rel target = $region3
    $region8: #{tpu_custom_call.1} parent=1 // loop_exit
      _
    %635 = vsyncpa [#allocation3], 1
    %s636 = scalar_lea.sflag [#allocation3], 1
    %637 = vsyncpa %s636, 1

</llo_original>
